<compile_context>
chip_gen: v5e
topology: v5e:2x2
jax: 0.10.0
libtpu: 0.0.40
codegen_flags: <defaults>
</compile_context>

<pallas_src>
import numpy as np
import jax
import jax.numpy as jnp
from jax.experimental import pallas as pl
from jax.experimental.pallas import tpu as pltpu


def _cdiv(a, b):
    return -(-a // b)


def _round_up(a, b):
    return _cdiv(a, b) * b


def _quantile_loss_kernel(q_ref, preds_ref, tgt_ref, out_ref, acc_ref):
    """Grid = (num_partials, steps). acc_ref: (TR, L) f32 running accumulator."""
    s = pl.program_id(1)

    @pl.when(s == 0)
    def _init():
        acc_ref[...] = jnp.zeros_like(acc_ref)

    q = q_ref[...]                                  # (1, L) f32, lane pattern q[c % Q]
    preds = preds_ref[...].astype(jnp.float32)      # (TR, L)
    target = tgt_ref[...].astype(jnp.float32)       # (TR, L)

    errors = target - preds
    # Hot path is pure VPU: sub, 2x mul, max, add.
    acc_ref[...] += jnp.maximum((q - 1.0) * errors, q * errors)

    @pl.when(s == pl.num_programs(1) - 1)
    def _finalize():
        # One sublane reduce per partial; lane reduce + mean done in wrapper (tiny).
        out_ref[...] = jnp.sum(acc_ref[...], axis=0, keepdims=True)


def quantile_loss(preds, target, quantiles, *, block_rows=512, num_partials=2):
    """preds: [B, Q], target: [B], quantiles: static list of length Q."""
    B, Q = preds.shape
    assert len(quantiles) == Q
    L = 128 * Q                      # lane-dense row width (multiple of 128)
    n = B * Q                        # true number of (sample, quantile) terms

    # Row/tile geometry.  TR is always a multiple of 8 (sublane alignment).
    R = _cdiv(n, L)                                        # rows needed
    TR = min(_round_up(block_rows, 8),
             _round_up(_cdiv(R, num_partials), 8))
    TR = max(TR, 8)
    S = _cdiv(R, num_partials * TR)                        # inner (reduction) steps
    R_pad = num_partials * S * TR
    pad = R_pad * L - n

    # Lane-dense flat layout (row-major): element (b, i) -> flat index b*Q + i.
    preds_flat = preds.reshape(-1)                         # free reshape
    tgt_flat = jnp.repeat(target, Q)                       # matching layout
    preds2 = jnp.pad(preds_flat, (0, pad)).reshape(R_pad, L)   # zero pad -> 0 loss
    tgt2 = jnp.pad(tgt_flat, (0, pad)).reshape(R_pad, L)

    # Quantile value at lane c is quantiles[c % Q]; tiny resident row.
    q_row = jnp.asarray(
        np.tile(np.asarray(quantiles, dtype=np.float32), 128)).reshape(1, L)

    partials = pl.pallas_call(
        _quantile_loss_kernel,
        out_shape=jax.ShapeDtypeStruct((1, num_partials * L), jnp.float32),
        grid_spec=pltpu.PrefetchScalarGridSpec(
            num_scalar_prefetch=0,
            grid=(num_partials, S),
            in_specs=[
                pl.BlockSpec((1, L), lambda p, s: (0, 0)),          # quantile row (resident)
                pl.BlockSpec((TR, L), lambda p, s: (p * S + s, 0)),  # preds tile
                pl.BlockSpec((TR, L), lambda p, s: (p * S + s, 0)),  # target tile
            ],
            out_specs=pl.BlockSpec((1, L), lambda p, s: (0, p)),     # per-partial row
            scratch_shapes=[pltpu.VMEM((TR, L), jnp.float32)],
        ),
        compiler_params=pltpu.CompilerParams(
            dimension_semantics=("parallel", "arbitrary")),
    )(q_row, preds2, tgt2)

    # Final lane reduction over all partial rows + mean over the TRUE batch size.
    return jnp.sum(partials) / B


def quantile_loss_ref(preds, target, quantiles):
    """Pure-JAX reference mirroring the PyTorch forward."""
    losses = []
    for i, q in enumerate(quantiles):
        errors = target - preds[:, i]
        losses.append(jnp.maximum((q - 1.0) * errors, q * errors)[:, None])
    return jnp.mean(jnp.sum(jnp.concatenate(losses, axis=1), axis=1))


if __name__ == "__main__":
    quantiles = [0.1, 0.5, 0.9]
    Q = len(quantiles)

    key = jax.random.PRNGKey(0)
    k1, k2, k3, k4 = jax.random.split(key, 4)

    # Small case (single inner step per partial).
    B = 8
    preds = jax.random.normal(k1, (B, Q), dtype=jnp.float32)
    target = jax.random.normal(k2, (B,), dtype=jnp.float32)
    loss = jax.block_until_ready(quantile_loss(preds, target, quantiles))
    ref = jax.block_until_ready(quantile_loss_ref(preds, target, quantiles))
    assert jnp.allclose(loss, ref, rtol=1e-5, atol=1e-5), (loss, ref)

    # Multi-tile case exercising the grid / accumulator / padding path.
    B2 = 2085
    preds2 = jax.random.normal(k3, (B2, Q), dtype=jnp.float32)
    target2 = jax.random.normal(k4, (B2,), dtype=jnp.float32)
    loss2 = jax.block_until_ready(
        quantile_loss(preds2, target2, quantiles, block_rows=8))
    ref2 = jax.block_until_ready(quantile_loss_ref(preds2, target2, quantiles))
    assert jnp.allclose(loss2, ref2, rtol=1e-4, atol=1e-5), (loss2, ref2)

    print("KERNEL_OK")
</pallas_src>

<mosaic_0001>
module attributes {stable_mosaic.version = 11 : i64} {
  func.func @_quantile_loss_kernel(%arg0: i32, %arg1: i32, %arg2: memref<1x384xf32, #tpu.memory_space<vmem>>, %arg3: memref<8x384xf32, #tpu.memory_space<vmem>>, %arg4: memref<8x384xf32, #tpu.memory_space<vmem>>, %arg5: memref<1x384xf32, #tpu.memory_space<vmem>>, %arg6: memref<8x384xf32, #tpu.memory_space<vmem>>) attributes {dimension_semantics = [#tpu.dimension_semantics<parallel>, #tpu.dimension_semantics<arbitrary>], iteration_bounds = array<i64: 2, 1>, scalar_prefetch = 0 : i64, scratch_operands = 1 : i64, tpu.core_type = #tpu.core_type<tc>, window_params = [{pipeline_mode = #tpu.pipeline_mode<synchronous>, transform_indices = @transform_0, window_bounds = array<i64: 1, 384>}, {transform_indices = @transform_1, window_bounds = array<i64: 8, 384>}, {transform_indices = @transform_2, window_bounds = array<i64: 8, 384>}, {transform_indices = @transform_3, window_bounds = array<i64: 1, 384>}]} {
    %c0_i32 = arith.constant 0 : i32
    %0 = arith.cmpi eq, %arg1, %c0_i32 : i32
    %1 = arith.extui %0 : i1 to i32
    %c0_i32_0 = arith.constant 0 : i32
    %2 = arith.cmpi ne, %1, %c0_i32_0 : i32
    scf.if %2 {
      %cst_12 = arith.constant 0.000000e+00 : f32
      %20 = vector.broadcast %cst_12 : f32 to vector<8x384xf32>
      %c0_13 = arith.constant 0 : index
      %c0_14 = arith.constant 0 : index
      %21 = vector.load %arg6[%c0_13, %c0_14] : memref<8x384xf32, #tpu.memory_space<vmem>>, vector<8x384xf32>
      tpu.vector_store %arg6[%c0_13, %c0_14], %20 {strides = array<i32>} : memref<8x384xf32, #tpu.memory_space<vmem>>, vector<8x384xf32>,
    } else {
    }
    %c0 = arith.constant 0 : index
    %c0_1 = arith.constant 0 : index
    %3 = vector.load %arg2[%c0, %c0_1] : memref<1x384xf32, #tpu.memory_space<vmem>>, vector<1x384xf32>
    %c0_2 = arith.constant 0 : index
    %c0_3 = arith.constant 0 : index
    %4 = vector.load %arg3[%c0_2, %c0_3] : memref<8x384xf32, #tpu.memory_space<vmem>>, vector<8x384xf32>
    %c0_4 = arith.constant 0 : index
    %c0_5 = arith.constant 0 : index
    %5 = vector.load %arg4[%c0_4, %c0_5] : memref<8x384xf32, #tpu.memory_space<vmem>>, vector<8x384xf32>
    %6 = arith.subf %5, %4 : vector<8x384xf32>
    %c0_6 = arith.constant 0 : index
    %c0_7 = arith.constant 0 : index
    %7 = vector.load %arg6[%c0_6, %c0_7] : memref<8x384xf32, #tpu.memory_space<vmem>>, vector<8x384xf32>
    %cst = arith.constant 1.000000e+00 : f32
    %8 = vector.broadcast %cst : f32 to vector<1x384xf32>
    %9 = arith.subf %3, %8 : vector<1x384xf32>
    %10 = vector.broadcast %9 : vector<1x384xf32> to vector<8x384xf32>
    %11 = arith.mulf %10, %6 : vector<8x384xf32>
    %12 = vector.broadcast %3 : vector<1x384xf32> to vector<8x384xf32>
    %13 = arith.mulf %12, %6 : vector<8x384xf32>
    %14 = arith.maximumf %11, %13 : vector<8x384xf32>
    %15 = arith.addf %7, %14 : vector<8x384xf32>
    %c0_8 = arith.constant 0 : index
    %c0_9 = arith.constant 0 : index
    %16 = vector.load %arg6[%c0_8, %c0_9] : memref<8x384xf32, #tpu.memory_space<vmem>>, vector<8x384xf32>
    tpu.vector_store %arg6[%c0_8, %c0_9], %15 {strides = array<i32>} : memref<8x384xf32, #tpu.memory_space<vmem>>, vector<8x384xf32>,
    %c0_i32_10 = arith.constant 0 : i32
    %17 = arith.cmpi eq, %arg1, %c0_i32_10 : i32
    %18 = arith.extui %17 : i1 to i32
    %c0_i32_11 = arith.constant 0 : i32
    %19 = arith.cmpi ne, %18, %c0_i32_11 : i32
    scf.if %19 {
      %c0_12 = arith.constant 0 : index
      %c0_13 = arith.constant 0 : index
      %20 = vector.load %arg6[%c0_12, %c0_13] : memref<8x384xf32, #tpu.memory_space<vmem>>, vector<8x384xf32>
      %cst_14 = arith.constant dense<0.000000e+00> : vector<384xf32>
      %21 = vector.multi_reduction <add>, %20, %cst_14 [0] : vector<8x384xf32> to vector<384xf32>
      %22 = vector.shape_cast %21 : vector<384xf32> to vector<1x384xf32>
      %c0_15 = arith.constant 0 : index
      %c0_16 = arith.constant 0 : index
      %23 = vector.load %arg5[%c0_15, %c0_16] : memref<1x384xf32, #tpu.memory_space<vmem>>, vector<1x384xf32>
      tpu.vector_store %arg5[%c0_15, %c0_16], %22 {strides = array<i32>} : memref<1x384xf32, #tpu.memory_space<vmem>>, vector<1x384xf32>,
    } else {
    }
    return
  }
  func.func @transform_0(%arg0: i32, %arg1: i32) -> (i32, i32) {
    %c0_i32 = arith.constant 0 : i32
    %c0_i32_0 = arith.constant 0 : i32
    %c0_i32_1 = arith.constant 0 : i32
    return %c0_i32, %c0_i32_0 : i32, i32
  }
  func.func @transform_1(%arg0: i32, %arg1: i32) -> (i32, i32) {
    %c1_i32 = arith.constant 1 : i32
    %0 = arith.muli %arg0, %c1_i32 : i32
    %1 = arith.addi %0, %arg1 : i32
    %c0_i32 = arith.constant 0 : i32
    %c0_i32_0 = arith.constant 0 : i32
    return %1, %c0_i32 : i32, i32
  }
  func.func @transform_2(%arg0: i32, %arg1: i32) -> (i32, i32) {
    %c1_i32 = arith.constant 1 : i32
    %0 = arith.muli %arg0, %c1_i32 : i32
    %1 = arith.addi %0, %arg1 : i32
    %c0_i32 = arith.constant 0 : i32
    %c0_i32_0 = arith.constant 0 : i32
    return %1, %c0_i32 : i32, i32
  }
  func.func @transform_3(%arg0: i32, %arg1: i32) -> (i32, i32) {
    %c0_i32 = arith.constant 0 : i32
    %c0_i32_0 = arith.constant 0 : i32
    return %c0_i32, %arg0 : i32, i32
  }
}

</mosaic_0001>

<llo_original>
// kernel: tpu_custom_call.1
$region0: #{tpu_custom_call.1}
  #allocation0 [shape = 'u32[]', space=smem, size = 0x4, offset = 0x4, fixed_abs, tag = 'smem constant byte address 0x4 - core index']
  #allocation1 [shape = 'u32[72,128]{1,0:T(1,128)}', space=vmem, size = 0x9000, scoped, tag = 'internal scratch']
  #allocation2 [shape = 'f32[8,384]{1,0:T(8,128)}', space=vmem, size = 0x3000, scoped, tag = 'scratch operand']
  %s0 = inlined_call_operand.hbm [shape: f32[1,384], index: 0, kind: input, shape index: {}]
  %s1 = inlined_call_operand.hbm [shape: f32[16,384], index: 1, kind: input, shape index: {}]
  %s2 = inlined_call_operand.hbm [shape: f32[16,384], index: 2, kind: input, shape index: {}]
  %s3 = inlined_call_operand.hbm [shape: f32[1,768], index: 3, kind: output, shape index: {}]
  %s4 = sld [smem:[#allocation0]]
  $region65: #{tpu_custom_call.1} parent=0
    _
  %s6 = ssub.s32 1, %s4
  %s7 = scalar_select 0, %s6, %s4
  $region1: #{tpu_custom_call.1} parent=0
    #allocation3 [shape = 'u8[1536]{0}', space=vmem, size = 0x800, scoped, tag = 'input window, operand 0, single buffered']
    #allocation4 [shape = 's32[2]{0}', space=sflag, size = 0x8, scoped, tag = 'scoped memory for tpu_custom_call.1']
    #allocation5 [shape = 's32[2]{0}', space=sflag, size = 0x8, scoped, tag = 'scoped memory for tpu_custom_call.1']
    #allocation6 [shape = 'u8[24576]{0}', space=vmem, size = 0x6000, scoped, tag = 'input window, operand 1']
    #allocation7 [shape = 's32[2]{0}', space=sflag, size = 0x8, scoped, tag = 'scoped memory for tpu_custom_call.1']
    #allocation8 [shape = 'u8[24576]{0}', space=vmem, size = 0x6000, scoped, tag = 'input window, operand 2']
    #allocation9 [shape = 'u8[3072]{0}', space=vmem, size = 0xc00, scoped, tag = 'output window, operand 0']
    %8 = vsyncpa [#allocation4], 0
    %9 = vsyncpa [#allocation7], 0
    %s10 = scalar_lea.sflag [#allocation7], 1
    %11 = vsyncpa %s10, 0
    %12 = vsyncpa [#allocation5], 0
    %s13 = scalar_lea.sflag [#allocation5], 1
    %14 = vsyncpa %s13, 0
    loop: start=0, step=1, limit=4
    $region2: #{tpu_custom_call.1} parent=1 // loop_pre_header
      _
    $region3: #{tpu_custom_call.1} parent=1 // loop_header
      %s16 = sphi 0, %s20
      %p17 = scmp.ge.s32.totalorder %s16, 4
      %s23 = sphi 0, %s35
      %s24 = sphi 0, %s31
      %s25 = sphi 0, %s23
      %s26 = sphi 0, %s24
      %s27 = sphi 0, %s25
      %s28 = sphi 0, %s26
      %s36 = sphi 0, %s36
      %s38 = sphi 0, %s36
      %s39 = sphi 0, %s38
      %s53 = sphi 0, %s39
      %s61 = sphi 0, %s63
      %s64 = sphi 0, %s61
      %s65 = sphi 0, %s64
      %s81 = sphi 0, %s65
      %s89 = sphi 0, %s91
      %s92 = sphi 0, %s89
      %s93 = sphi 0, %s92
      %s109 = sphi 0, %s93
      %s115 = sphi 0, %s117
      %s118 = sphi 0, %s115
      %s119 = sphi 0, %s118
      %s135 = sphi 0, %s119
    $region4: #{tpu_custom_call.1} parent=1 // loop_header_branch
      %19 = sbr.rel (%p17) target = $region8
    $region5: #{tpu_custom_call.1} parent=1 // loop_body
      %s21 = ssub.s32 %s16, 1
      %s22 = ssub.s32 %s16, 2
      %s29 = sadd.s32 1, %s24
      %p30 = scmp.ge.s32.totalorder %s29, 1
      %s31 = scalar_select %p30, 0, %s29
      %s32 = sadd.s32 1, %s23
      %s33 = scalar_select %p30, %s32, %s23
      %p34 = scmp.ge.s32.totalorder %s33, 2
      %s35 = scalar_select %p34, 0, %s33
      %s37 = sadd.s32 %s36, 1
      %p40 = scmp.eq.s32.totalorder %s16, 1
      %p41 = scmp.ne.s32.totalorder %s36, %s38
      %p42 = scmp.eq.s32.totalorder %s16, 0
      %p43 = por %p41, %p42
      %p44 = scmp.ne.s32.totalorder %s36, %s38
      %p45 = scmp.eq.s32.totalorder %s21, 1
      %p46 = por %p44, %p45
      %p47 = scmp.ne.s32.totalorder %s38, %s39
      %p48 = scmp.eq.s32.totalorder %s21, 0
      %p49 = por %p47, %p48
      %p50 = scmp.ne.s32.totalorder %s38, %s39
      %p51 = scmp.eq.s32.totalorder %s22, 1
      %p52 = por %p50, %p51
      %p54 = scmp.ne.s32.totalorder %s39, %s53
      %p55 = scmp.eq.s32.totalorder %s22, 0
      %p56 = por %p54, %p55
      %s57 = sadd.s32 %s23, %s24
      %s58 = sadd.s32 %s35, %s31
      %s59 = ssub.s32 %s57, %s58
      %p60 = scmp.eq.s32.totalorder %s59, 0
      %s62 = sadd.s32 %s61, 1
      %s63 = scalar_select %p60, %s61, %s62
      %p66 = pneg %p60
      %p67 = scmp.eq.s32.totalorder %s16, 1
      %p68 = por %p66, %p67
      %p69 = scmp.ne.s32.totalorder %s61, %s64
      %p70 = scmp.eq.s32.totalorder %s16, 0
      %p71 = por %p69, %p70
      %p72 = scmp.ne.s32.totalorder %s61, %s64
      %p73 = scmp.eq.s32.totalorder %s21, 1
      %p74 = por %p72, %p73
      %p75 = scmp.ne.s32.totalorder %s64, %s65
      %p76 = scmp.eq.s32.totalorder %s21, 0
      %p77 = por %p75, %p76
      %p78 = scmp.ne.s32.totalorder %s64, %s65
      %p79 = scmp.eq.s32.totalorder %s22, 1
      %p80 = por %p78, %p79
      %p82 = scmp.ne.s32.totalorder %s65, %s81
      %p83 = scmp.eq.s32.totalorder %s22, 0
      %p84 = por %p82, %p83
      %s85 = sadd.s32 %s23, %s24
      %s86 = sadd.s32 %s35, %s31
      %s87 = ssub.s32 %s85, %s86
      %p88 = scmp.eq.s32.totalorder %s87, 0
      %s90 = sadd.s32 %s89, 1
      %s91 = scalar_select %p88, %s89, %s90
      %p94 = pneg %p88
      %p95 = scmp.eq.s32.totalorder %s16, 1
      %p96 = por %p94, %p95
      %p97 = scmp.ne.s32.totalorder %s89, %s92
      %p98 = scmp.eq.s32.totalorder %s16, 0
      %p99 = por %p97, %p98
      %p100 = scmp.ne.s32.totalorder %s89, %s92
      %p101 = scmp.eq.s32.totalorder %s21, 1
      %p102 = por %p100, %p101
      %p103 = scmp.ne.s32.totalorder %s92, %s93
      %p104 = scmp.eq.s32.totalorder %s21, 0
      %p105 = por %p103, %p104
      %p106 = scmp.ne.s32.totalorder %s92, %s93
      %p107 = scmp.eq.s32.totalorder %s22, 1
      %p108 = por %p106, %p107
      %p110 = scmp.ne.s32.totalorder %s93, %s109
      %p111 = scmp.eq.s32.totalorder %s22, 0
      %p112 = por %p110, %p111
      %s113 = ssub.s32 %s23, %s35
      %p114 = scmp.eq.s32.totalorder %s113, 0
      %s116 = sadd.s32 %s115, 1
      %s117 = scalar_select %p114, %s115, %s116
      %p120 = pneg %p114
      %p121 = scmp.eq.s32.totalorder %s16, 1
      %p122 = por %p120, %p121
      %p123 = scmp.ne.s32.totalorder %s115, %s118
      %p124 = scmp.eq.s32.totalorder %s16, 0
      %p125 = por %p123, %p124
      %p126 = scmp.ne.s32.totalorder %s115, %s118
      %p127 = scmp.eq.s32.totalorder %s21, 1
      %p128 = por %p126, %p127
      %p129 = scmp.ne.s32.totalorder %s118, %s119
      %p130 = scmp.eq.s32.totalorder %s21, 0
      %p131 = por %p129, %p130
      %p132 = scmp.ne.s32.totalorder %s118, %s119
      %p133 = scmp.eq.s32.totalorder %s22, 1
      %p134 = por %p132, %p133
      %p136 = scmp.ne.s32.totalorder %s119, %s135
      %p137 = scmp.eq.s32.totalorder %s22, 0
      %p138 = por %p136, %p137
      %p139 = scmp.le.s32.totalorder 1, %s16
      %p140 = scmp.lt.s32.totalorder %s16, 3
      %p141 = pnand %p139, %p140
      %p142 = pneg %p141
      // Predicated region
      $region9: #{tpu_custom_call.1} parent=5 // pred_check
        _
      $region10: #{tpu_custom_call.1} parent=5 // pred_check_branch
        %144 = sbr.rel (%p141) target = $region12
      $region11: #{tpu_custom_call.1} parent=5 // pred_region
        %s145 = ssub.s32 %s16, 1
        // Predicated region
        $region13: #{tpu_custom_call.1} parent=11 // pred_check
          %p146 = pneg %p49
        $region14: #{tpu_custom_call.1} parent=11 // pred_check_branch
          %148 = sbr.rel (%p146) target = $region16
        $region15: #{tpu_custom_call.1} parent=11 // pred_region
          %150 = vsyncadd [#allocation4], 0
          %s152 = sshll.u32 %s0, 4
          %s153 = int_to_ptr.hbm [resolvable:$true] %s152
          %s154 = sshll.u32 [#allocation3], 4
          %s155 = int_to_ptr.vmem [resolvable:$true] %s154
          %157 = dma.hbm_to_vmem [thread:$0]  %s153, 48, %s155, [#allocation4]
        $region16: #{tpu_custom_call.1} parent=11 // pred_fallthru
          _
      $region12: #{tpu_custom_call.1} parent=5 // pred_fallthru
        _
      %p158 = scmp.lt.s32.totalorder %s16, 2
      // Predicated region
      $region17: #{tpu_custom_call.1} parent=5 // pred_check
        %p159 = pneg %p158
      $region18: #{tpu_custom_call.1} parent=5 // pred_check_branch
        %161 = sbr.rel (%p159) target = $region20
      $region19: #{tpu_custom_call.1} parent=5 // pred_region
        // Predicated region
        $region21: #{tpu_custom_call.1} parent=19 // pred_check
          %p162 = pneg %p71
        $region22: #{tpu_custom_call.1} parent=19 // pred_check_branch
          %164 = sbr.rel (%p162) target = $region24
        $region23: #{tpu_custom_call.1} parent=19 // pred_region
          %s165 = sand.u32 %s16, 1
          %s166 = scalar_lea.sflag [#allocation7], %s165
          %s167 = sand.u32 %s61, 1
          %s168 = smul.addr %s167, 24
          %s169 = scalar_lea.vmem [#allocation6], %s168
          %s170 = sadd.s32 %s23, %s24
          %172 = vsyncadd %s166, 0
          %s173 = smul.addr %s170, 3
          %s174 = smul.addr %s173, 8
          %s175 = scalar_lea.hbm %s1, %s174
          %s177 = sshll.u32 %s175, 4
          %s178 = int_to_ptr.hbm [resolvable:$true] %s177
          %s179 = sshll.u32 %s169, 4
          %s180 = int_to_ptr.vmem [resolvable:$true] %s179
          %182 = dma.hbm_to_vmem [thread:$0]  %s178, 384, %s180, %s166
        $region24: #{tpu_custom_call.1} parent=19 // pred_fallthru
          _
        // Predicated region
        $region25: #{tpu_custom_call.1} parent=19 // pred_check
          %p183 = pneg %p99
        $region26: #{tpu_custom_call.1} parent=19 // pred_check_branch
          %185 = sbr.rel (%p183) target = $region28
        $region27: #{tpu_custom_call.1} parent=19 // pred_region
          %s186 = sand.u32 %s16, 1
          %s187 = scalar_lea.sflag [#allocation7], %s186
          %s188 = sand.u32 %s89, 1
          %s189 = smul.addr %s188, 24
          %s190 = scalar_lea.vmem [#allocation8], %s189
          %s191 = sadd.s32 %s23, %s24
          %193 = vsyncadd %s187, 0
          %s194 = smul.addr %s191, 3
          %s195 = smul.addr %s194, 8
          %s196 = scalar_lea.hbm %s2, %s195
          %s198 = sshll.u32 %s196, 4
          %s199 = int_to_ptr.hbm [resolvable:$true] %s198
          %s200 = sshll.u32 %s190, 4
          %s201 = int_to_ptr.vmem [resolvable:$true] %s200
          %203 = dma.hbm_to_vmem [thread:$0]  %s199, 384, %s201, %s187
        $region28: #{tpu_custom_call.1} parent=19 // pred_fallthru
          _
      $region20: #{tpu_custom_call.1} parent=5 // pred_fallthru
        _
      %p204 = scmp.le.s32.totalorder 1, %s16
      %p205 = scmp.lt.s32.totalorder %s16, 3
      %p206 = pnand %p204, %p205
      %p207 = pneg %p206
      // Predicated region
      $region29: #{tpu_custom_call.1} parent=5 // pred_check
        _
      $region30: #{tpu_custom_call.1} parent=5 // pred_check_branch
        %209 = sbr.rel (%p206) target = $region32
      $region31: #{tpu_custom_call.1} parent=5 // pred_region
        %s210 = ssub.s32 %s16, 1
        // Predicated region
        $region33: #{tpu_custom_call.1} parent=31 // pred_check
          %p211 = pneg %p49
        $region34: #{tpu_custom_call.1} parent=31 // pred_check_branch
          %213 = sbr.rel (%p211) target = $region36
        $region35: #{tpu_custom_call.1} parent=31 // pred_region
          %215 = dma.done [#allocation4], 48
        $region36: #{tpu_custom_call.1} parent=31 // pred_fallthru
          _
        %s216 = sand.u32 %s21, 1
        %s217 = scalar_lea.sflag [#allocation7], %s216
        %s218 = sand.u32 %s64, 1
        %s219 = smul.addr %s218, 24
        %s220 = scalar_lea.vmem [#allocation6], %s219
        // Predicated region
        $region37: #{tpu_custom_call.1} parent=31 // pred_check
          %p221 = pneg %p77
        $region38: #{tpu_custom_call.1} parent=31 // pred_check_branch
          %223 = sbr.rel (%p221) target = $region40
        $region39: #{tpu_custom_call.1} parent=31 // pred_region
          %225 = dma.done %s217, 384
        $region40: #{tpu_custom_call.1} parent=31 // pred_fallthru
          _
        %s226 = sand.u32 %s21, 1
        %s227 = scalar_lea.sflag [#allocation7], %s226
        %s228 = sand.u32 %s92, 1
        %s229 = smul.addr %s228, 24
        %s230 = scalar_lea.vmem [#allocation8], %s229
        // Predicated region
        $region41: #{tpu_custom_call.1} parent=31 // pred_check
          %p231 = pneg %p105
        $region42: #{tpu_custom_call.1} parent=31 // pred_check_branch
          %233 = sbr.rel (%p231) target = $region44
        $region43: #{tpu_custom_call.1} parent=31 // pred_region
          %235 = dma.done %s227, 384
        $region44: #{tpu_custom_call.1} parent=31 // pred_fallthru
          _
        %p236 = pneg %p49
        %p237 = pneg %p46
        %s238 = sand.u32 %s21, 1
        %s239 = scalar_lea.sflag [#allocation7], %s238
        %s240 = sand.u32 %s64, 1
        %s241 = smul.addr %s240, 24
        %s242 = scalar_lea.vmem [#allocation6], %s241
        %p243 = pneg %p77
        %p244 = pneg %p74
        %s245 = sand.u32 %s21, 1
        %s246 = scalar_lea.sflag [#allocation7], %s245
        %s247 = sand.u32 %s92, 1
        %s248 = smul.addr %s247, 24
        %s249 = scalar_lea.vmem [#allocation8], %s248
        %p250 = pneg %p105
        %p251 = pneg %p102
        %p252 = pneg %p131
        %p253 = pneg %p128
        %s254 = sand.u32 %s118, 1
        %s255 = scalar_lea.sflag [#allocation5], %s254
        %s256 = sand.u32 %s118, 1
        %s257 = smul.addr %s256, 3
        %s258 = scalar_lea.vmem [#allocation9], %s257
        %s259 = sadd.s32 %s25, %s26
        %s260 = sadd.s32 %s25, %s26
        %s261 = smul.u32 3, %s25
        %p262 = scmp.eq.s32.totalorder %s26, 0
        // Predicated region
        $region45: #{tpu_custom_call.1} parent=31 // pred_check
          %p263 = pneg %p262
        $region46: #{tpu_custom_call.1} parent=31 // pred_check_branch
          %265 = sbr.rel (%p263) target = $region48
        $region47: #{tpu_custom_call.1} parent=31 // pred_region
          %266 = vst [vmem:[#allocation2] sm:$0xff] 0.0
          %267 = vst [vmem:[#allocation2 + $0x8] sm:$0xff] 0.0
          %268 = vst [vmem:[#allocation2 + $0x10] sm:$0xff] 0.0
        $region48: #{tpu_custom_call.1} parent=31 // pred_fallthru
          _
        %v269 = vld [vmem:[#allocation3] sm:$0x7]
        %v270 = vld [vmem:[%s220] sm:$0xff]
        %v271 = vld [vmem:[%s220 + $0x8] sm:$0xff]
        %v272 = vld [vmem:[%s220 + $0x10] sm:$0xff]
        %v273 = vld [vmem:[%s230] sm:$0xff]
        %v274 = vld [vmem:[%s230 + $0x8] sm:$0xff]
        %v275 = vld [vmem:[%s230 + $0x10] sm:$0xff]
        %v276 = vsub.f32 %v273, %v270
        %v277 = vsub.f32 %v274, %v271
        %v278 = vsub.f32 %v275, %v272
        %v279 = vld [vmem:[#allocation2] sm:$0xff]
        %v280 = vld [vmem:[#allocation2 + $0x8] sm:$0xff]
        %v281 = vld [vmem:[#allocation2 + $0x10] sm:$0xff]
        %v282 = vsub.f32 %v269, 1.0
        %v284 = vperm.slane %v282, 0
        %v285 = vperm.slane %v282, 1
        %v286 = vperm.slane %v282, 2
        %v290 = vmul.f32 %v284, %v276
        %v291 = vmul.f32 %v285, %v277
        %v292 = vmul.f32 %v286, %v278
        %v294 = vperm.slane %v269, 0
        %v295 = vperm.slane %v269, 1
        %v296 = vperm.slane %v269, 2
        %v300 = vmul.f32 %v294, %v276
        %v301 = vmul.f32 %v295, %v277
        %v302 = vmul.f32 %v296, %v278
        %v303 = vmax.f32 %v290, %v300
        %v304 = vmax.f32 %v291, %v301
        %v305 = vmax.f32 %v292, %v302
        %v306 = vadd.f32 %v279, %v303
        %v307 = vadd.f32 %v280, %v304
        %v308 = vadd.f32 %v281, %v305
        %309 = vst [vmem:[#allocation2] sm:$0xff] %v306
        %310 = vst [vmem:[#allocation2 + $0x8] sm:$0xff] %v307
        %311 = vst [vmem:[#allocation2 + $0x10] sm:$0xff] %v308
        // Predicated region
        $region49: #{tpu_custom_call.1} parent=31 // pred_check
          %p312 = pneg %p262
        $region50: #{tpu_custom_call.1} parent=31 // pred_check_branch
          %314 = sbr.rel (%p312) target = $region52
        $region51: #{tpu_custom_call.1} parent=31 // pred_region
          %v315 = vld [vmem:[#allocation2] sm:$0xff]
          %v316 = vld [vmem:[#allocation2 + $0x8] sm:$0xff]
          %v317 = vld [vmem:[#allocation2 + $0x10] sm:$0xff]
          %v318 = vrot.slane %v315, 4
          %v319 = vadd.f32 %v315, %v318
          %v320 = vrot.slane %v319, 2
          %v321 = vadd.f32 %v319, %v320
          %v322 = vrot.slane %v321, 1
          %v323 = vadd.f32 %v321, %v322
          %v324 = vrot.slane %v316, 4
          %v325 = vadd.f32 %v316, %v324
          %v326 = vrot.slane %v325, 2
          %v327 = vadd.f32 %v325, %v326
          %v328 = vrot.slane %v327, 1
          %v329 = vadd.f32 %v327, %v328
          %v330 = vrot.slane %v317, 4
          %v331 = vadd.f32 %v317, %v330
          %v332 = vrot.slane %v331, 2
          %v333 = vadd.f32 %v331, %v332
          %v334 = vrot.slane %v333, 1
          %v335 = vadd.f32 %v333, %v334
          %v339 = vrot.slane %v329, 7
          %v340 = vrot.slane %v335, 6
          %vm341 = vcmask 1040384
          %v342 = vsel %vm341, %v323, %v339
          %vm343 = vcmask 1041408
          %v344 = vsel %vm343, %v342, %v340
          %v346 = vlaneseq
          %vm347 = vcmp.ge.s32.totalorder %v346, 0
          %vm348 = vcmp.lt.s32.totalorder %v346, 384
          %vm349 = vmand %vm347, %vm348
          %350 = vst.msk [vmem:[%s258] sm:$0x7] %vm349, %v344
        $region52: #{tpu_custom_call.1} parent=31 // pred_fallthru
          _
        %s351 = sand.u32 %s118, 1
        %s352 = scalar_lea.sflag [#allocation5], %s351
        %s353 = sand.u32 %s118, 1
        %s354 = smul.addr %s353, 3
        %s355 = scalar_lea.vmem [#allocation9], %s354
        // Predicated region
        $region53: #{tpu_custom_call.1} parent=31 // pred_check
          %p356 = pneg %p128
        $region54: #{tpu_custom_call.1} parent=31 // pred_check_branch
          %358 = sbr.rel (%p356) target = $region56
        $region55: #{tpu_custom_call.1} parent=31 // pred_region
          %s359 = smul.u32 3, %s25
          %361 = vsyncadd %s352, 0
          %s362 = scalar_lea.hbm %s3, %s359
          %s364 = sshll.u32 %s355, 4
          %s365 = int_to_ptr.vmem [resolvable:$true] %s364
          %s366 = sshll.u32 %s362, 4
          %s367 = int_to_ptr.hbm [resolvable:$true] %s366
          %369 = dma.vmem_to_hbm [thread:$0]  %s365, 48, %s367, %s352
        $region56: #{tpu_custom_call.1} parent=31 // pred_fallthru
          _
      $region32: #{tpu_custom_call.1} parent=5 // pred_fallthru
        _
      %p370 = scmp.le.s32.totalorder 2, %s16
      // Predicated region
      $region57: #{tpu_custom_call.1} parent=5 // pred_check
        %p371 = pneg %p370
      $region58: #{tpu_custom_call.1} parent=5 // pred_check_branch
        %373 = sbr.rel (%p371) target = $region60
      $region59: #{tpu_custom_call.1} parent=5 // pred_region
        %s374 = ssub.s32 %s16, 2
        // Predicated region
        $region61: #{tpu_custom_call.1} parent=59 // pred_check
          %p375 = pneg %p134
        $region62: #{tpu_custom_call.1} parent=59 // pred_check_branch
          %377 = sbr.rel (%p375) target = $region64
        $region63: #{tpu_custom_call.1} parent=59 // pred_region
          %s378 = sand.u32 %s119, 1
          %s379 = scalar_lea.sflag [#allocation5], %s378
          %s380 = sand.u32 %s119, 1
          %s381 = smul.addr %s380, 3
          %s382 = scalar_lea.vmem [#allocation9], %s381
          %384 = dma.done %s379, 48
        $region64: #{tpu_custom_call.1} parent=59 // pred_fallthru
          _
      $region60: #{tpu_custom_call.1} parent=5 // pred_fallthru
        _
    $region6: #{tpu_custom_call.1} parent=1 // loop_footer
      %s20 = sadd.s32 1, %s16
    $region7: #{tpu_custom_call.1} parent=1 // loop_footer_branch
      %15 = sbr.rel target = $region3
    $region8: #{tpu_custom_call.1} parent=1 // loop_exit
      _
    %385 = vsyncpa [#allocation4], 1
    %s386 = scalar_lea.sflag [#allocation4], 1
    %387 = vsyncpa %s386, 1
    %388 = vsyncpa [#allocation7], 1
    %s389 = scalar_lea.sflag [#allocation7], 1
    %390 = vsyncpa %s389, 1
    %391 = vsyncpa [#allocation5], 1
    %s392 = scalar_lea.sflag [#allocation5], 1
    %393 = vsyncpa %s392, 1

</llo_original>
